<compile_context>
chip_gen: v6e
topology: v6e:2x2x1
jax: 0.10.0
libtpu: 0.0.40
codegen_flags: <defaults>
</compile_context>

<pallas_src>
import jax
import jax.numpy as jnp
from jax.experimental import pallas as pl
from jax.experimental.pallas import tpu as pltpu


def _mf_kernel(ue_ref, ie_ref, ub_ref, ib_ref, out_ref):
    # ue_ref/ie_ref: (D, TB) float32 in VMEM  (batch on lanes)
    # ub_ref/ib_ref/out_ref: (1, TB) float32 in VMEM (lane-dense)
    prod = ue_ref[...] * ie_ref[...]                       # VPU, full-lane
    dot = jnp.sum(prod, axis=0, keepdims=True)             # sublane reduce -> (1, TB)
    out_ref[...] = dot + ub_ref[...] + ib_ref[...]         # lane-dense store


def _round_up(x, m):
    return (x + m - 1) // m * m


def mf_forward(uids, iids, user_emb, item_emb, user_bias, item_bias, *, tb=1024):
    """MF forward.  uids/iids: (B,) int32.  Returns (B,) float32."""
    B = int(uids.shape[0])
    D = int(user_emb.shape[1])

    # --- tiling: batch lives on the lane axis, so tiles are multiples of 128.
    B_pad = _round_up(B, 128)
    tb_eff = max(128, min(int(tb), B_pad))
    tb_eff = (tb_eff // 128) * 128
    # Keep >= 2 grid steps when the padded batch allows it (v7x: 2 TCs/chip).
    if B_pad >= 256 and B_pad // tb_eff < 2:
        tb_eff = max(128, ((B_pad // 2) // 128) * 128)
    B_pad = _round_up(B_pad, tb_eff)
    n_tiles = B_pad // tb_eff

    # --- pad indices (with a valid id, 0) and gather in plain JAX (glue).
    pad = B_pad - B
    uids_p = jnp.pad(uids, (0, pad))
    iids_p = jnp.pad(iids, (0, pad))

    # Transposed, lane-dense slabs: (D, B_pad) with batch on the lane axis.
    ue_t = jnp.take(user_emb, uids_p, axis=0).T            # (D, B_pad)
    ie_t = jnp.take(item_emb, iids_p, axis=0).T            # (D, B_pad)
    ub = jnp.take(user_bias[:, 0], uids_p, axis=0)[None, :]  # (1, B_pad)
    ib = jnp.take(item_bias[:, 0], iids_p, axis=0)[None, :]  # (1, B_pad)

    out = pl.pallas_call(
        _mf_kernel,
        out_shape=jax.ShapeDtypeStruct((1, B_pad), jnp.float32),
        grid_spec=pltpu.PrefetchScalarGridSpec(
            num_scalar_prefetch=0,
            grid=(n_tiles,),
            in_specs=[
                pl.BlockSpec((D, tb_eff), lambda i: (0, i)),
                pl.BlockSpec((D, tb_eff), lambda i: (0, i)),
                pl.BlockSpec((1, tb_eff), lambda i: (0, i)),
                pl.BlockSpec((1, tb_eff), lambda i: (0, i)),
            ],
            out_specs=pl.BlockSpec((1, tb_eff), lambda i: (0, i)),
        ),
        compiler_params=pltpu.CompilerParams(
            dimension_semantics=("parallel",),
        ),
    )(ue_t, ie_t, ub, ib)

    return out[0, :B]                                      # (B,)


def make_params(key, n_users, n_items, embedding_dim):
    ku, ki = jax.random.split(key)
    # ScaledEmbedding: normal(0, 1) scaled by 1/embedding_dim.
    user_emb = jax.random.normal(ku, (n_users, embedding_dim), jnp.float32) / embedding_dim
    item_emb = jax.random.normal(ki, (n_items, embedding_dim), jnp.float32) / embedding_dim
    # ZeroEmbedding: initialized to zeros.
    user_bias = jnp.zeros((n_users, 1), jnp.float32)
    item_bias = jnp.zeros((n_items, 1), jnp.float32)
    return user_emb, item_emb, user_bias, item_bias


if __name__ == "__main__":
    key = jax.random.PRNGKey(0)
    n_users, n_items, embedding_dim = 64, 128, 32
    B = 16

    k_params, k_u, k_i = jax.random.split(key, 3)
    user_emb, item_emb, user_bias, item_bias = make_params(
        k_params, n_users, n_items, embedding_dim
    )
    uids = jax.random.randint(k_u, (B,), 0, n_users, dtype=jnp.int32)
    iids = jax.random.randint(k_i, (B,), 0, n_items, dtype=jnp.int32)

    out = mf_forward(uids, iids, user_emb, item_emb, user_bias, item_bias)
    out = jax.block_until_ready(out)

    # Pure-JAX reference check.
    ref = (
        jnp.sum(user_emb[uids] * item_emb[iids], axis=1)
        + user_bias[uids, 0]
        + item_bias[iids, 0]
    )
    assert out.shape == (B,)
    assert jnp.allclose(out, ref, atol=1e-5, rtol=1e-5)

    print("KERNEL_OK")
</pallas_src>

<mosaic_0001>
module attributes {stable_mosaic.version = 11 : i64} {
  func.func @_mf_kernel(%arg0: i32, %arg1: memref<32x128xf32, #tpu.memory_space<vmem>>, %arg2: memref<32x128xf32, #tpu.memory_space<vmem>>, %arg3: memref<1x128xf32, #tpu.memory_space<vmem>>, %arg4: memref<1x128xf32, #tpu.memory_space<vmem>>, %arg5: memref<1x128xf32, #tpu.memory_space<vmem>>) attributes {dimension_semantics = [#tpu.dimension_semantics<parallel>], iteration_bounds = array<i64: 1>, scalar_prefetch = 0 : i64, scratch_operands = 0 : i64, tpu.core_type = #tpu.core_type<tc>, window_params = [{transform_indices = @transform_0, window_bounds = array<i64: 32, 128>}, {transform_indices = @transform_1, window_bounds = array<i64: 32, 128>}, {transform_indices = @transform_2, window_bounds = array<i64: 1, 128>}, {transform_indices = @transform_3, window_bounds = array<i64: 1, 128>}, {transform_indices = @transform_4, window_bounds = array<i64: 1, 128>}]} {
    %c0 = arith.constant 0 : index
    %c0_0 = arith.constant 0 : index
    %0 = vector.load %arg1[%c0, %c0_0] : memref<32x128xf32, #tpu.memory_space<vmem>>, vector<32x128xf32>
    %c0_1 = arith.constant 0 : index
    %c0_2 = arith.constant 0 : index
    %1 = vector.load %arg2[%c0_1, %c0_2] : memref<32x128xf32, #tpu.memory_space<vmem>>, vector<32x128xf32>
    %2 = arith.mulf %0, %1 : vector<32x128xf32>
    %cst = arith.constant dense<0.000000e+00> : vector<128xf32>
    %3 = vector.multi_reduction <add>, %2, %cst [0] : vector<32x128xf32> to vector<128xf32>
    %4 = vector.shape_cast %3 : vector<128xf32> to vector<1x128xf32>
    %c0_3 = arith.constant 0 : index
    %c0_4 = arith.constant 0 : index
    %5 = vector.load %arg3[%c0_3, %c0_4] : memref<1x128xf32, #tpu.memory_space<vmem>>, vector<1x128xf32>
    %6 = arith.addf %4, %5 : vector<1x128xf32>
    %c0_5 = arith.constant 0 : index
    %c0_6 = arith.constant 0 : index
    %7 = vector.load %arg4[%c0_5, %c0_6] : memref<1x128xf32, #tpu.memory_space<vmem>>, vector<1x128xf32>
    %8 = arith.addf %6, %7 : vector<1x128xf32>
    %c0_7 = arith.constant 0 : index
    %c0_8 = arith.constant 0 : index
    %9 = vector.load %arg5[%c0_7, %c0_8] : memref<1x128xf32, #tpu.memory_space<vmem>>, vector<1x128xf32>
    tpu.vector_store %arg5[%c0_7, %c0_8], %8 {strides = array<i32>} : memref<1x128xf32, #tpu.memory_space<vmem>>, vector<1x128xf32>,
    return
  }
  func.func @transform_0(%arg0: i32) -> (i32, i32) {
    %c0_i32 = arith.constant 0 : i32
    %c0_i32_0 = arith.constant 0 : i32
    return %c0_i32, %arg0 : i32, i32
  }
  func.func @transform_1(%arg0: i32) -> (i32, i32) {
    %c0_i32 = arith.constant 0 : i32
    %c0_i32_0 = arith.constant 0 : i32
    return %c0_i32, %arg0 : i32, i32
  }
  func.func @transform_2(%arg0: i32) -> (i32, i32) {
    %c0_i32 = arith.constant 0 : i32
    %c0_i32_0 = arith.constant 0 : i32
    return %c0_i32, %arg0 : i32, i32
  }
  func.func @transform_3(%arg0: i32) -> (i32, i32) {
    %c0_i32 = arith.constant 0 : i32
    %c0_i32_0 = arith.constant 0 : i32
    return %c0_i32, %arg0 : i32, i32
  }
  func.func @transform_4(%arg0: i32) -> (i32, i32) {
    %c0_i32 = arith.constant 0 : i32
    %c0_i32_0 = arith.constant 0 : i32
    return %c0_i32, %arg0 : i32, i32
  }
}

</mosaic_0001>

<llo_original>
// kernel: tpu_custom_call.1
$region0: #{tpu_custom_call.1}
  #allocation0 [shape = 'u32[]', space=smem, size = 0x4, offset = 0x4, fixed_abs, tag = 'smem constant byte address 0x4 - core index']
  #allocation1 [shape = 'u32[144,128]{1,0:T(1,128)}', space=vmem, size = 0x12000, scoped, tag = 'internal scratch']
  %s0 = inlined_call_operand.hbm [shape: f32[32,128], index: 0, kind: input, shape index: {}]
  %s1 = inlined_call_operand.hbm [shape: f32[32,128], index: 1, kind: input, shape index: {}]
  %s2 = inlined_call_operand.vmem [shape: f32[1,128], index: 2, kind: input, shape index: {}]
  %s3 = inlined_call_operand.vmem [shape: f32[1,128], index: 3, kind: input, shape index: {}]
  %s4 = inlined_call_operand.hbm [shape: f32[1,128], index: 4, kind: output, shape index: {}]
  %s5 = sld [smem:[#allocation0]]
  $region34: #{tpu_custom_call.1} parent=0
    _
  %s7 = ssub.s32 1, %s5
  %s8 = scalar_select 0, %s7, %s5
  $region1: #{tpu_custom_call.1} parent=0
    #allocation2 [shape = 'u8[16384]{0}', space=vmem, size = 0x4000, scoped, tag = 'input window, operand 0, single buffered']
    #allocation3 [shape = 's32[1]{0}', space=sflag, size = 0x4, scoped, tag = 'scoped memory for tpu_custom_call.1']
    #allocation4 [shape = 's32[1]{0}', space=sflag, size = 0x4, scoped, tag = 'scoped memory for tpu_custom_call.1']
    #allocation5 [shape = 'u8[16384]{0}', space=vmem, size = 0x4000, scoped, tag = 'input window, operand 1, single buffered']
    #allocation6 [shape = 's32[1]{0}', space=sflag, size = 0x4, scoped, tag = 'scoped memory for tpu_custom_call.1']
    #allocation7 [shape = 'u8[512]{0}', space=vmem, size = 0x400, scoped, tag = 'output window, operand 0, single buffered']
    %9 = vsyncpa [#allocation3], 0
    %10 = vsyncpa [#allocation6], 0
    %11 = vsyncpa [#allocation4], 0
    // Predicated region
    $region2: #{tpu_custom_call.1} parent=1 // pred_check
      _
    $region3: #{tpu_custom_call.1} parent=1 // pred_check_branch
      %13 = sbr.rel (0) target = $region5
    $region4: #{tpu_custom_call.1} parent=1 // pred_region
      %s15 = ssub.s32 512, 512
      %16 = vsyncadd [#allocation3], %s15
      %s17 = sshll.u32 [#allocation2], 4
      %s18 = int_to_ptr.vmem [resolvable:$true] %s17
      %23 = dma.hbm_to_vmem [thread:$0]  %s0, 512, %s18, [#allocation3], 128, 128, 8
    $region5: #{tpu_custom_call.1} parent=1 // pred_fallthru
      _
    // Predicated region
    $region6: #{tpu_custom_call.1} parent=1 // pred_check
      _
    $region7: #{tpu_custom_call.1} parent=1 // pred_check_branch
      %25 = sbr.rel (0) target = $region9
    $region8: #{tpu_custom_call.1} parent=1 // pred_region
      %s27 = ssub.s32 512, 512
      %28 = vsyncadd [#allocation6], %s27
      %s29 = sshll.u32 [#allocation5], 4
      %s30 = int_to_ptr.vmem [resolvable:$true] %s29
      %35 = dma.hbm_to_vmem [thread:$0]  %s1, 512, %s30, [#allocation6], 128, 128, 8
    $region9: #{tpu_custom_call.1} parent=1 // pred_fallthru
      _
    // Predicated region
    $region10: #{tpu_custom_call.1} parent=1 // pred_check
      _
    $region11: #{tpu_custom_call.1} parent=1 // pred_check_branch
      %37 = sbr.rel (0) target = $region13
    $region12: #{tpu_custom_call.1} parent=1 // pred_region
      _
    $region13: #{tpu_custom_call.1} parent=1 // pred_fallthru
      _
    // Predicated region
    $region14: #{tpu_custom_call.1} parent=1 // pred_check
      _
    $region15: #{tpu_custom_call.1} parent=1 // pred_check_branch
      %39 = sbr.rel (0) target = $region17
    $region16: #{tpu_custom_call.1} parent=1 // pred_region
      _
    $region17: #{tpu_custom_call.1} parent=1 // pred_fallthru
      _
    // Predicated region
    $region18: #{tpu_custom_call.1} parent=1 // pred_check
      _
    $region19: #{tpu_custom_call.1} parent=1 // pred_check_branch
      %41 = sbr.rel (0) target = $region21
    $region20: #{tpu_custom_call.1} parent=1 // pred_region
      %42 = dma.done [#allocation3], 512
    $region21: #{tpu_custom_call.1} parent=1 // pred_fallthru
      _
    // Predicated region
    $region22: #{tpu_custom_call.1} parent=1 // pred_check
      _
    $region23: #{tpu_custom_call.1} parent=1 // pred_check_branch
      %44 = sbr.rel (0) target = $region25
    $region24: #{tpu_custom_call.1} parent=1 // pred_region
      %45 = dma.done [#allocation6], 512
    $region25: #{tpu_custom_call.1} parent=1 // pred_fallthru
      _
    %v46 = vld [vmem:[#allocation2] sm:$0xff]
    %v47 = vld [vmem:[#allocation2 + $0x8] sm:$0xff]
    %v48 = vld [vmem:[#allocation2 + $0x10] sm:$0xff]
    %v49 = vld [vmem:[#allocation2 + $0x18] sm:$0xff]
    %v50 = vld [vmem:[#allocation5] sm:$0xff]
    %v51 = vld [vmem:[#allocation5 + $0x8] sm:$0xff]
    %v52 = vld [vmem:[#allocation5 + $0x10] sm:$0xff]
    %v53 = vld [vmem:[#allocation5 + $0x18] sm:$0xff]
    %v54 = vmul.f32 %v46, %v50
    %v55 = vmul.f32 %v47, %v51
    %v56 = vmul.f32 %v48, %v52
    %v57 = vmul.f32 %v49, %v53
    %v58 = vadd.f32 %v54, %v55
    %v59 = vadd.f32 %v58, %v56
    %v60 = vadd.f32 %v59, %v57
    %v61 = vrot.slane %v60, 4
    %v62 = vadd.f32 %v60, %v61
    %v63 = vrot.slane %v62, 2
    %v64 = vadd.f32 %v62, %v63
    %v65 = vrot.slane %v64, 1
    %v66 = vadd.f32 %v64, %v65
    %v67 = vld [vmem:[%s2] sm:$0x1]
    %v68 = vadd.f32 %v66, %v67
    %v69 = vld [vmem:[%s3] sm:$0x1]
    %v70 = vadd.f32 %v68, %v69
    %71 = vst [vmem:[#allocation7] sm:$0x1] %v70
    // Predicated region
    $region26: #{tpu_custom_call.1} parent=1 // pred_check
      _
    $region27: #{tpu_custom_call.1} parent=1 // pred_check_branch
      %73 = sbr.rel (0) target = $region29
    $region28: #{tpu_custom_call.1} parent=1 // pred_region
      %s75 = ssub.s32 16, 16
      %76 = vsyncadd [#allocation4], %s75
      %s78 = sshll.u32 [#allocation7], 4
      %s79 = int_to_ptr.vmem [resolvable:$true] %s78
      %81 = dma.vmem_to_hbm [thread:$0]  %s79, 16, %s4, [#allocation4]
    $region29: #{tpu_custom_call.1} parent=1 // pred_fallthru
      _
    // Predicated region
    $region30: #{tpu_custom_call.1} parent=1 // pred_check
      _
    $region31: #{tpu_custom_call.1} parent=1 // pred_check_branch
      %83 = sbr.rel (0) target = $region33
    $region32: #{tpu_custom_call.1} parent=1 // pred_region
      %84 = dma.done [#allocation4], 16
    $region33: #{tpu_custom_call.1} parent=1 // pred_fallthru
      _
    %85 = vsyncpa [#allocation3], 1
    %86 = vsyncpa [#allocation6], 1
    %87 = vsyncpa [#allocation4], 1

</llo_original>
